<compile_context>
chip_gen: v7x
topology: tpu7x:2x2x1
jax: 0.10.0
libtpu: 0.0.40
codegen_flags: <defaults>
</compile_context>

<pallas_src>
import functools

import jax
import jax.numpy as jnp
from jax.experimental import pallas as pl
from jax.experimental.pallas import tpu as pltpu


def _round_up(a: int, b: int) -> int:
    return -(-a // b) * b


def _conv_matmul_kernel(w_ref, p_ref, o_ref):
    # w_ref: (C_out, KC_pad)   p_ref: (KC_pad, T)   o_ref: (C_out, T)
    o_ref[...] = jnp.dot(
        w_ref[...], p_ref[...], preferred_element_type=jnp.float32
    ).astype(o_ref.dtype)


@functools.partial(jax.jit, static_argnames=("stride", "dilation"))
def conv1d_pallas(x, w, *, stride, dilation):
    B, C_in, L = x.shape
    C_out, C_in_w, K = w.shape
    assert C_in == C_in_w
    L_out = (L - dilation * (K - 1) - 1) // stride + 1
    assert L_out >= 1, "input length too small for kernel/dilation"

    KC = K * C_in
    KC_pad = _round_up(KC, 8)           # 9 -> 16 (clean sublane multiple, zeros)
    itemsize = jnp.dtype(x.dtype).itemsize

    # ---- gather: one strided/dilated slice per kernel tap (fusable into DMA) -----
    # taps[k][b, ci, lo] = x[b, ci, lo*stride + k*dilation]
    taps = []
    for k in range(K):
        start = k * dilation
        end = start + stride * (L_out - 1) + 1
        taps.append(jax.lax.slice(x, (0, 0, start), (B, C_in, end), (1, 1, stride)))
    if KC_pad > KC:                      # contraction zero-pad folded into the concat
        taps.append(jnp.zeros((B, KC_pad - KC, L_out), x.dtype))
    stacked = jnp.concatenate(taps, axis=1)            # (B, KC_pad, L_out)

    # weights flattened with the same (k-major, ci-minor) ordering, padded once
    w2 = jnp.transpose(w, (0, 2, 1)).reshape(C_out, KC).astype(x.dtype)
    w2 = jnp.pad(w2, ((0, 0), (0, KC_pad - KC)))       # (C_out, KC_pad), tiny

    cost = pl.CostEstimate(
        flops=2 * B * C_out * KC * L_out,
        transcendentals=0,
        bytes_accessed=itemsize
        * (B * KC_pad * L_out + C_out * KC_pad + B * C_out * L_out),
    )
    T_CAP = 2048                         # lane columns per grid step (multiple of 128)

    if L_out >= 128:
        # ---- Path A: lane-dense per-batch layout, NCL output written directly ----
        patches = stacked                               # (B, KC_pad, L_out)
        TL = L_out if L_out <= T_CAP else T_CAP
        n_lt = pl.cdiv(L_out, TL)                       # last tile masked by Pallas
        out = pl.pallas_call(
            _conv_matmul_kernel,
            out_shape=jax.ShapeDtypeStruct((B, C_out, L_out), x.dtype),
            grid=(B, n_lt),
            in_specs=[
                pl.BlockSpec((C_out, KC_pad), lambda b, j: (0, 0)),     # grid-invariant
                pl.BlockSpec((None, KC_pad, TL), lambda b, j: (b, 0, j)),
            ],
            out_specs=pl.BlockSpec((None, C_out, TL), lambda b, j: (b, 0, j)),
            compiler_params=pltpu.CompilerParams(
                dimension_semantics=("parallel", "parallel"),
                vmem_limit_bytes=32 * 1024 * 1024,
                allow_input_fusion=[False, True],
            ),
            cost_estimate=cost,
        )(w2, patches)
        return out                                       # already (B, C_out, L_out)

    # ---- Path B: small per-batch L_out -> fold batch into the lane (N) dim -------
    N = B * L_out
    patches = jnp.transpose(stacked, (1, 0, 2)).reshape(KC_pad, N)
    if N <= 256:
        TN = N                                           # single step, full-dim block
    else:
        # >=2 grid steps (v7x megacore) while keeping TN a multiple of 128
        TN = min(T_CAP, _round_up(pl.cdiv(N, 2), 128))
    n_nt = pl.cdiv(N, TN)                                # last tile masked by Pallas
    out = pl.pallas_call(
        _conv_matmul_kernel,
        out_shape=jax.ShapeDtypeStruct((C_out, N), x.dtype),
        grid=(n_nt,),
        in_specs=[
            pl.BlockSpec((C_out, KC_pad), lambda j: (0, 0)),             # grid-invariant
            pl.BlockSpec((KC_pad, TN), lambda j: (0, j)),
        ],
        out_specs=pl.BlockSpec((C_out, TN), lambda j: (0, j)),
        compiler_params=pltpu.CompilerParams(
            dimension_semantics=("parallel",),
            vmem_limit_bytes=32 * 1024 * 1024,
            allow_input_fusion=[False, True],
        ),
        cost_estimate=cost,
    )(w2, patches)
    # small output in this regime -> cheap layout fix to PyTorch NCL
    out = jnp.transpose(out.reshape(C_out, B, L_out), (1, 0, 2))
    return out


if __name__ == "__main__":
    # module hyper-parameters
    in_channels, out_channels = 3, 64
    kernel_size, stride, dilation = 3, 3, 4

    # small deterministic inputs
    B, L = 2, 32  # L_out = (32 - 4*2 - 1)//3 + 1 = 8
    key = jax.random.PRNGKey(0)
    kx, kw = jax.random.split(key)
    x = jax.random.normal(kx, (B, in_channels, L), dtype=jnp.float32)
    w = 0.1 * jax.random.normal(
        kw, (out_channels, in_channels, kernel_size), dtype=jnp.float32
    )

    y = conv1d_pallas(x, w, stride=stride, dilation=dilation)
    y = jax.block_until_ready(y)

    # reference check against XLA's conv (same semantics as nn.Conv1d, bias=False)
    ref = jax.lax.conv_general_dilated(
        x, w,
        window_strides=(stride,),
        padding="VALID",
        rhs_dilation=(dilation,),
        dimension_numbers=("NCH", "OIH", "NCH"),
    )
    assert y.shape == ref.shape, (y.shape, ref.shape)
    assert jnp.allclose(y, ref, atol=1e-4, rtol=1e-4)

    print("KERNEL_OK")
</pallas_src>

<mosaic_0001>
module attributes {stable_mosaic.version = 11 : i64} {
  func.func @_conv_matmul_kernel(%arg0: i32, %arg1: memref<64x16xf32, #tpu.memory_space<vmem>>, %arg2: memref<16x16xf32, #tpu.memory_space<vmem>>, %arg3: memref<64x16xf32, #tpu.memory_space<vmem>>) attributes {dimension_semantics = [#tpu.dimension_semantics<parallel>], iteration_bounds = array<i64: 1>, scalar_prefetch = 0 : i64, scratch_operands = 0 : i64, tpu.core_type = #tpu.core_type<tc>, window_params = [{pipeline_mode = #tpu.pipeline_mode<synchronous>, transform_indices = @transform_0, window_bounds = array<i64: 64, 16>}, {transform_indices = @transform_1, window_bounds = array<i64: 16, 16>}, {transform_indices = @transform_2, window_bounds = array<i64: 64, 16>}]} {
    %c0 = arith.constant 0 : index
    %c0_0 = arith.constant 0 : index
    %0 = vector.load %arg1[%c0, %c0_0] : memref<64x16xf32, #tpu.memory_space<vmem>>, vector<64x16xf32>
    %c0_1 = arith.constant 0 : index
    %c0_2 = arith.constant 0 : index
    %1 = vector.load %arg2[%c0_1, %c0_2] : memref<16x16xf32, #tpu.memory_space<vmem>>, vector<16x16xf32>
    %cst = arith.constant dense<0.000000e+00> : vector<64x16xf32>
    %2 = tpu.matmul %0, %1, %cst {dimension_numbers = #tpu.dot_dimension_numbers<[1], [0], [0], [1], [0, 0, 1, 1], [], []>} : vector<64x16xf32>, vector<16x16xf32>, vector<64x16xf32> -> vector<64x16xf32>
    %c0_3 = arith.constant 0 : index
    %c0_4 = arith.constant 0 : index
    %3 = vector.load %arg3[%c0_3, %c0_4] : memref<64x16xf32, #tpu.memory_space<vmem>>, vector<64x16xf32>
    tpu.vector_store %arg3[%c0_3, %c0_4], %2 {strides = array<i32>} : memref<64x16xf32, #tpu.memory_space<vmem>>, vector<64x16xf32>,
    return
  }
  func.func @transform_0(%arg0: i32) -> (i32, i32) {
    %c0_i32 = arith.constant 0 : i32
    %c0_i32_0 = arith.constant 0 : i32
    %c0_i32_1 = arith.constant 0 : i32
    return %c0_i32, %c0_i32_0 : i32, i32
  }
  func.func @transform_1(%arg0: i32) -> (i32, i32) {
    %c0_i32 = arith.constant 0 : i32
    %c0_i32_0 = arith.constant 0 : i32
    return %c0_i32, %arg0 : i32, i32
  }
  func.func @transform_2(%arg0: i32) -> (i32, i32) {
    %c0_i32 = arith.constant 0 : i32
    %c0_i32_0 = arith.constant 0 : i32
    return %c0_i32, %arg0 : i32, i32
  }
}

</mosaic_0001>

<llo_original>
// kernel: conv1d_pallas.1
$region0: #{conv1d_pallas.1}
  #allocation0 [shape = 'u32[]', space=smem, size = 0x4, offset = 0x4, fixed_abs, tag = 'smem constant byte address 0x4 - core index']
  #allocation1 [shape = 'u32[144,128]{1,0:T(1,128)}', space=vmem, size = 0x12000, scoped, tag = 'internal scratch']
  %s0 = inlined_call_operand.vmem [shape: f32[64,16], index: 0, kind: input, shape index: {}]
  %s1 = inlined_call_operand.vmem [shape: f32[16,16], index: 1, kind: input, shape index: {}]
  %s2 = inlined_call_operand.vmem [shape: f32[64,16], index: 2, kind: output, shape index: {}]
  %s3 = sld [smem:[#allocation0]]
  $region18: #{conv1d_pallas.1} parent=0
    _
  %s5 = ssub.s32 1, %s3
  %s6 = scalar_select 0, %s5, %s3
  // Predicated region
  $region2: #{conv1d_pallas.1} parent=0 // pred_check
    _
  $region3: #{conv1d_pallas.1} parent=0 // pred_check_branch
    %8 = sbr.rel (0) target = $region5
  $region4: #{conv1d_pallas.1} parent=0 // pred_region
    _
  $region5: #{conv1d_pallas.1} parent=0 // pred_fallthru
    _
  // Predicated region
  $region6: #{conv1d_pallas.1} parent=0 // pred_check
    _
  $region7: #{conv1d_pallas.1} parent=0 // pred_check_branch
    %10 = sbr.rel (0) target = $region9
  $region8: #{conv1d_pallas.1} parent=0 // pred_region
    _
  $region9: #{conv1d_pallas.1} parent=0 // pred_fallthru
    _
  %v11 = vld [vmem:[%s0] sm:$0xff]
  %v12 = vld [vmem:[%s0 + $0x8] sm:$0xff]
  %v13 = vld [vmem:[%s0 + $0x10] sm:$0xff]
  %v14 = vld [vmem:[%s0 + $0x18] sm:$0xff]
  %v15 = vld [vmem:[%s0 + $0x20] sm:$0xff]
  %v16 = vld [vmem:[%s0 + $0x28] sm:$0xff]
  %v17 = vld [vmem:[%s0 + $0x30] sm:$0xff]
  %v18 = vld [vmem:[%s0 + $0x38] sm:$0xff]
  %v19 = vld [vmem:[%s1] sm:$0xff]
  %v20 = vld [vmem:[%s1 + $0x8] sm:$0xff]
  %vm21 = vcmask 130048
  %v23 = vsel %vm21, %v11, 0
  %v26 = vsel %vm21, %v12, 0
  %v29 = vsel %vm21, %v13, 0
  %v32 = vsel %vm21, %v14, 0
  %v35 = vsel %vm21, %v15, 0
  %v38 = vsel %vm21, %v16, 0
  %v41 = vsel %vm21, %v17, 0
  %v44 = vsel %vm21, %v18, 0
  %46 = vmatprep.subr.mxu0 0.0
  %47 = vmatpush1.msra.mxu0 %v19
  %48 = vmatprep.subr.mxu0 0.0
  %49 = vmatpush1.msra.mxu0 %v20
  %50 = vmatprep.subr.mxu0 0.0
  %51 = vmatpush1.msra.mxu0 0.0
  %52 = vmatprep.subr.mxu0 0.0
  %53 = vmatpush1.msra.mxu0 0.0
  %54 = vmatprep.subr.mxu0 0.0
  %55 = vmatpush1.msra.mxu0 0.0
  %56 = vmatprep.subr.mxu0 0.0
  %57 = vmatpush1.msra.mxu0 0.0
  %58 = vmatprep.subr.mxu0 0.0
  %59 = vmatpush1.msra.mxu0 0.0
  %60 = vmatprep.subr.mxu0 0.0
  %61 = vmatpush1.msra.mxu0 0.0
  %62 = vmatprep.subr.mxu0 0.0
  %63 = vmatpush1.msra.mxu0 0.0
  %64 = vmatprep.subr.mxu0 0.0
  %65 = vmatpush1.msra.mxu0 0.0
  %66 = vmatprep.subr.mxu0 0.0
  %67 = vmatpush1.msra.mxu0 0.0
  %68 = vmatprep.subr.mxu0 0.0
  %69 = vmatpush1.msra.mxu0 0.0
  %70 = vmatprep.subr.mxu0 0.0
  %71 = vmatpush1.msra.mxu0 0.0
  %72 = vmatprep.subr.mxu0 0.0
  %73 = vmatpush1.msra.mxu0 0.0
  %74 = vmatprep.subr.mxu0 0.0
  %75 = vmatpush1.msra.mxu0 0.0
  %76 = vmatprep.subr.mxu0 0.0
  %77 = vmatpush1.msra.mxu0 0.0
  %78 = vmatprep.subr.mxu0 0.0
  %79 = vmatpush1.msra.mxu0 0.0
  %80 = vmatprep.subr.mxu0 0.0
  %81 = vmatpush1.msra.mxu0 0.0
  %82 = vmatprep.subr.mxu0 0.0
  %83 = vmatpush1.msra.mxu0 0.0
  %84 = vmatprep.subr.mxu0 0.0
  %85 = vmatpush1.msra.mxu0 0.0
  %86 = vmatprep.subr.mxu0 0.0
  %87 = vmatpush1.msra.mxu0 0.0
  %88 = vmatprep.subr.mxu0 0.0
  %89 = vmatpush1.msra.mxu0 0.0
  %90 = vmatprep.subr.mxu0 0.0
  %91 = vmatpush1.msra.mxu0 0.0
  %92 = vmatprep.subr.mxu0 0.0
  %93 = vmatpush1.msra.mxu0 0.0
  %94 = vmatprep.subr.mxu0 0.0
  %95 = vmatpush1.msra.mxu0 0.0
  %96 = vmatprep.subr.mxu0 0.0
  %97 = vmatpush1.msra.mxu0 0.0
  %98 = vmatprep.subr.mxu0 0.0
  %99 = vmatpush1.msra.mxu0 0.0
  %100 = vmatprep.subr.mxu0 0.0
  %101 = vmatpush1.msra.mxu0 0.0
  %102 = vmatprep.subr.mxu0 0.0
  %103 = vmatpush1.msra.mxu0 0.0
  %104 = vmatprep.subr.mxu0 0.0
  %105 = vmatpush1.msra.mxu0 0.0
  %106 = vmatprep.subr.mxu0 0.0
  %107 = vmatpush1.msra.mxu0 0.0
  %108 = vmatprep.subr.mxu0 0.0
  %109 = vmatpush1.msra.mxu0 0.0
  %110 = vmatprep.mubr.f32.mxu0 0.0
  %111 = vmatmul.mubr.f32.gmra.mrb[0].mxu0 %v23
  %v112 = vpop.f32.mrb[0].mxu0
  %v113 = vadd.f32 0.0, %v112
  %v114 = vpop.f32.mrb[0].mxu0
  %115 = vmatprep.mubr.f32.mxu0 0.0
  %116 = vmatmul.mubr.f32.gmra.mrb[0].mxu0 %v26
  %v117 = vpop.f32.mrb[0].mxu0
  %v118 = vadd.f32 0.0, %v117
  %v119 = vpop.f32.mrb[0].mxu0
  %120 = vmatprep.mubr.f32.mxu0 0.0
  %121 = vmatmul.mubr.f32.gmra.mrb[0].mxu0 %v29
  %v122 = vpop.f32.mrb[0].mxu0
  %v123 = vadd.f32 0.0, %v122
  %v124 = vpop.f32.mrb[0].mxu0
  %125 = vmatprep.mubr.f32.mxu0 0.0
  %126 = vmatmul.mubr.f32.gmra.mrb[0].mxu0 %v32
  %v127 = vpop.f32.mrb[0].mxu0
  %v128 = vadd.f32 0.0, %v127
  %v129 = vpop.f32.mrb[0].mxu0
  %130 = vmatprep.mubr.f32.mxu0 0.0
  %131 = vmatmul.mubr.f32.gmra.mrb[0].mxu0 %v35
  %v132 = vpop.f32.mrb[0].mxu0
  %v133 = vadd.f32 0.0, %v132
  %v134 = vpop.f32.mrb[0].mxu0
  %135 = vmatprep.mubr.f32.mxu0 0.0
  %136 = vmatmul.mubr.f32.gmra.mrb[0].mxu0 %v38
  %v137 = vpop.f32.mrb[0].mxu0
  %v138 = vadd.f32 0.0, %v137
  %v139 = vpop.f32.mrb[0].mxu0
  %140 = vmatprep.mubr.f32.mxu0 0.0
  %141 = vmatmul.mubr.f32.gmra.mrb[0].mxu0 %v41
  %v142 = vpop.f32.mrb[0].mxu0
  %v143 = vadd.f32 0.0, %v142
  %v144 = vpop.f32.mrb[0].mxu0
  %145 = vmatprep.mubr.f32.mxu0 0.0
  %146 = vmatmul.mubr.f32.gmra.mrb[0].mxu0 %v44
  %v147 = vpop.f32.mrb[0].mxu0
  %v148 = vadd.f32 0.0, %v147
  %v149 = vpop.f32.mrb[0].mxu0
  %150 = vdwg.mxu0
  %151 = vst.msk [vmem:[%s2] sm:$0xff] %vm21, %v113
  %152 = vst.msk [vmem:[%s2 + $0x8] sm:$0xff] %vm21, %v118
  %153 = vst.msk [vmem:[%s2 + $0x10] sm:$0xff] %vm21, %v123
  %154 = vst.msk [vmem:[%s2 + $0x18] sm:$0xff] %vm21, %v128
  %155 = vst.msk [vmem:[%s2 + $0x20] sm:$0xff] %vm21, %v133
  %156 = vst.msk [vmem:[%s2 + $0x28] sm:$0xff] %vm21, %v138
  %157 = vst.msk [vmem:[%s2 + $0x30] sm:$0xff] %vm21, %v143
  %158 = vst.msk [vmem:[%s2 + $0x38] sm:$0xff] %vm21, %v148
  // Predicated region
  $region10: #{conv1d_pallas.1} parent=0 // pred_check
    _
  $region11: #{conv1d_pallas.1} parent=0 // pred_check_branch
    %160 = sbr.rel (0) target = $region13
  $region12: #{conv1d_pallas.1} parent=0 // pred_region
    _
  $region13: #{conv1d_pallas.1} parent=0 // pred_fallthru
    _
  // Predicated region
  $region14: #{conv1d_pallas.1} parent=0 // pred_check
    _
  $region15: #{conv1d_pallas.1} parent=0 // pred_check_branch
    %162 = sbr.rel (0) target = $region17
  $region16: #{conv1d_pallas.1} parent=0 // pred_region
    _
  $region17: #{conv1d_pallas.1} parent=0 // pred_fallthru
    _

</llo_original>
